<compile_context>
chip_gen: v6e
topology: v6e:2x2x1
jax: 0.10.0
libtpu: 0.0.40
codegen_flags: <defaults>
</compile_context>

<pallas_src>
import functools
from typing import NamedTuple

import jax
import jax.numpy as jnp
from jax import lax
from jax.experimental import pallas as pl
from jax.experimental.pallas import tpu as pltpu


class KG(NamedTuple):
    """Container mirroring bayesfunc's KG(ii, it, tt)."""
    ii: jax.Array
    it: jax.Array
    tt: jax.Array


def _features_to_kernel_kernel(x_ref, ii_ref, it_ref, tt_ref,
                               *, inducing, in_features, epsilon):
    # Per-grid-step refs:
    #   x_ref : (Sb, P, F)
    #   ii_ref: (Sb, I, I), it_ref: (Sb, I, T), tt_ref: (Sb, 1, T)
    I = inducing
    inv_f = jnp.float32(1.0 / in_features)

    x = x_ref[...]                 # (Sb, P, F), native dtype (bf16 stays bf16)
    xi = x[:, :I, :]               # (Sb, I, F)
    xt = x[:, I:, :]               # (Sb, T, F)

    # Batched A @ B^T: contract over F (last, lane-major) axis, batch over Sb.
    dn = (((2,), (2,)), ((0,), (0,)))
    ii = lax.dot_general(xi, xi, dimension_numbers=dn,
                         preferred_element_type=jnp.float32) * inv_f  # (Sb,I,I)
    it = lax.dot_general(xi, xt, dimension_numbers=dn,
                         preferred_element_type=jnp.float32) * inv_f  # (Sb,I,T)

    xt_f32 = xt.astype(jnp.float32)                  # keep square-sum in f32
    tt = jnp.sum(xt_f32 * xt_f32, axis=-1) * inv_f   # (Sb, T)

    if epsilon is not None:
        eps = jnp.float32(epsilon)
        n = ii.shape[-1]
        row = lax.broadcasted_iota(jnp.int32, (n, n), 0)
        col = lax.broadcasted_iota(jnp.int32, (n, n), 1)
        diag = (row == col)[None, :, :]              # (1, I, I), no jnp.eye
        ii = jnp.where(diag, ii + eps, ii)
        tt = tt + eps

    ii_ref[...] = ii.astype(ii_ref.dtype)
    it_ref[...] = it.astype(it_ref.dtype)
    tt_ref[...] = tt[:, None, :].astype(tt_ref.dtype)


def _pick_sample_block(S, per_sample_bytes, vmem_budget_bytes, max_sample_block):
    """Largest divisor of S that fits the VMEM budget; keep >= 2 grid steps."""
    cap = max(1, min(S, max_sample_block,
                     vmem_budget_bytes // max(per_sample_bytes, 1)))
    if S >= 2:
        cap = min(cap, max(1, S // 2))   # keep >=2 parallel steps (v7x: 2 TCs)
    sb = 1
    for d in range(1, cap + 1):
        if S % d == 0:
            sb = d
    return sb


def features_to_kernel(x, inducing_batch, epsilon=None, *, max_sample_block=32):
    """Pallas implementation of FeaturesToKernel.forward."""
    S, P, F = x.shape
    I = inducing_batch
    T = P - I
    assert 0 < I < P, "need both inducing and test rows"

    itemsize = jnp.dtype(x.dtype).itemsize

    # Rough per-sample VMEM working set: double-buffered input + outputs,
    # plus in-kernel f32 temporaries.
    in_bytes = P * F * itemsize
    out_bytes = (I * I + I * T + T) * itemsize
    acc_bytes = (I * I + I * T + T * F) * 4
    per_sample = 2 * (in_bytes + out_bytes) + acc_bytes

    try:
        vmem_cap = int(getattr(pltpu.get_tpu_info(), "vmem_capacity_bytes",
                               64 * 1024 * 1024))
    except Exception:
        vmem_cap = 64 * 1024 * 1024
    budget = vmem_cap // 2            # headroom for compiler scratch / spills

    Sb = _pick_sample_block(S, per_sample, budget, max_sample_block)
    grid = (S // Sb,)

    cp_kwargs = dict(dimension_semantics=("parallel",))
    need = Sb * per_sample
    if need > (24 << 20):             # above-ish the default scoped VMEM limit
        cp_kwargs["vmem_limit_bytes"] = int(min(vmem_cap, need + (8 << 20)))
    compiler_params = pltpu.CompilerParams(**cp_kwargs)

    kern = functools.partial(_features_to_kernel_kernel,
                             inducing=I, in_features=F, epsilon=epsilon)

    out_shapes = (
        jax.ShapeDtypeStruct((S, I, I), x.dtype),
        jax.ShapeDtypeStruct((S, I, T), x.dtype),
        jax.ShapeDtypeStruct((S, 1, T), x.dtype),
    )

    ii, it, tt3 = pl.pallas_call(
        kern,
        out_shape=out_shapes,
        grid_spec=pltpu.PrefetchScalarGridSpec(
            num_scalar_prefetch=0,
            grid=grid,
            in_specs=[
                pl.BlockSpec((Sb, P, F), lambda s: (s, 0, 0)),
            ],
            out_specs=[
                pl.BlockSpec((Sb, I, I), lambda s: (s, 0, 0)),
                pl.BlockSpec((Sb, I, T), lambda s: (s, 0, 0)),
                pl.BlockSpec((Sb, 1, T), lambda s: (s, 0, 0)),
            ],
        ),
        compiler_params=compiler_params,
    )(x)

    return KG(ii=ii, it=it, tt=tt3[:, 0, :])


def _reference(x, inducing_batch, epsilon=None):
    F = x.shape[-1]
    xi = x[:, :inducing_batch]
    xt = x[:, inducing_batch:]
    ii = jnp.einsum('sif,sjf->sij', xi, xi) / F
    it = jnp.einsum('sif,stf->sit', xi, xt) / F
    tt = jnp.sum(xt ** 2, axis=-1) / F
    if epsilon is not None:
        ii = ii + epsilon * jnp.eye(ii.shape[-1], dtype=ii.dtype)
        tt = tt + epsilon
    return KG(ii, it, tt)


if __name__ == "__main__":
    # Small shapes: S=2 samples, inducing_batch=8, test points=8, features=32.
    S, I, T, F = 2, 8, 8, 32
    inducing_batch = I
    epsilon = 1e-3

    key = jax.random.PRNGKey(0)
    x = jax.random.normal(key, (S, I + T, F), dtype=jnp.float32)

    out = features_to_kernel(x, inducing_batch, epsilon=epsilon)
    jax.block_until_ready(out)

    ref = _reference(x, inducing_batch, epsilon=epsilon)
    assert jnp.allclose(out.ii, ref.ii, atol=1e-5, rtol=1e-5)
    assert jnp.allclose(out.it, ref.it, atol=1e-5, rtol=1e-5)
    assert jnp.allclose(out.tt, ref.tt, atol=1e-5, rtol=1e-5)

    print("KERNEL_OK")
</pallas_src>

<mosaic_0001>
module attributes {stable_mosaic.version = 11 : i64} {
  func.func @_features_to_kernel_kernel(%arg0: i32, %arg1: memref<1x16x32xf32, #tpu.memory_space<vmem>>, %arg2: memref<1x8x8xf32, #tpu.memory_space<vmem>>, %arg3: memref<1x8x8xf32, #tpu.memory_space<vmem>>, %arg4: memref<1x1x8xf32, #tpu.memory_space<vmem>>) attributes {dimension_semantics = [#tpu.dimension_semantics<parallel>], iteration_bounds = array<i64: 2>, scalar_prefetch = 0 : i64, scratch_operands = 0 : i64, tpu.core_type = #tpu.core_type<tc>, window_params = [{transform_indices = @transform_0, window_bounds = array<i64: 1, 16, 32>}, {transform_indices = @transform_1, window_bounds = array<i64: 1, 8, 8>}, {transform_indices = @transform_2, window_bounds = array<i64: 1, 8, 8>}, {transform_indices = @transform_3, window_bounds = array<i64: 1, 1, 8>}]} {
    %c0 = arith.constant 0 : index
    %c0_0 = arith.constant 0 : index
    %c0_1 = arith.constant 0 : index
    %0 = vector.load %arg1[%c0, %c0_0, %c0_1] : memref<1x16x32xf32, #tpu.memory_space<vmem>>, vector<1x16x32xf32>
    %1 = vector.extract_strided_slice %0 {offsets = [0, 0, 0], sizes = [1, 8, 32], strides = [1, 1, 1]} : vector<1x16x32xf32> to vector<1x8x32xf32>
    %2 = vector.extract_strided_slice %0 {offsets = [0, 8, 0], sizes = [1, 8, 32], strides = [1, 1, 1]} : vector<1x16x32xf32> to vector<1x8x32xf32>
    %cst = arith.constant dense<0.000000e+00> : vector<1x8x8xf32>
    %3 = tpu.matmul %1, %1, %cst {dimension_numbers = #tpu.dot_dimension_numbers<[2], [2], [1], [1], [0, 0, 0, 1, 1, 1], [0], [0]>} : vector<1x8x32xf32>, vector<1x8x32xf32>, vector<1x8x8xf32> -> vector<1x8x8xf32>
    %cst_2 = arith.constant 3.125000e-02 : f32
    %4 = vector.broadcast %cst_2 : f32 to vector<1x8x8xf32>
    %5 = arith.mulf %3, %4 : vector<1x8x8xf32>
    %cst_3 = arith.constant dense<0.000000e+00> : vector<1x8x8xf32>
    %6 = tpu.matmul %1, %2, %cst_3 {dimension_numbers = #tpu.dot_dimension_numbers<[2], [2], [1], [1], [0, 0, 0, 1, 1, 1], [0], [0]>} : vector<1x8x32xf32>, vector<1x8x32xf32>, vector<1x8x8xf32> -> vector<1x8x8xf32>
    %cst_4 = arith.constant 3.125000e-02 : f32
    %7 = vector.broadcast %cst_4 : f32 to vector<1x8x8xf32>
    %8 = arith.mulf %6, %7 : vector<1x8x8xf32>
    %9 = arith.mulf %2, %2 : vector<1x8x32xf32>
    %cst_5 = arith.constant dense<0.000000e+00> : vector<1x8xf32>
    %10 = vector.multi_reduction <add>, %9, %cst_5 [2] : vector<1x8x32xf32> to vector<1x8xf32>
    %cst_6 = arith.constant 3.125000e-02 : f32
    %11 = vector.broadcast %cst_6 : f32 to vector<1x8xf32>
    %12 = arith.mulf %10, %11 : vector<1x8xf32>
    %13 = tpu.iota {dimensions = array<i32: 0>} : vector<8x8xi32>
    %14 = tpu.iota {dimensions = array<i32: 1>} : vector<8x8xi32>
    %15 = arith.cmpi eq, %13, %14 : vector<8x8xi32>
    %16 = vector.shape_cast %15 : vector<8x8xi1> to vector<1x8x8xi1>
    %cst_7 = arith.constant 1.000000e-03 : f32
    %17 = vector.broadcast %cst_7 : f32 to vector<1x8x8xf32>
    %18 = arith.addf %5, %17 : vector<1x8x8xf32>
    %19 = arith.select %16, %18, %5 : vector<1x8x8xi1>, vector<1x8x8xf32>
    %cst_8 = arith.constant 1.000000e-03 : f32
    %20 = vector.broadcast %cst_8 : f32 to vector<1x8xf32>
    %21 = arith.addf %12, %20 : vector<1x8xf32>
    %c0_9 = arith.constant 0 : index
    %c0_10 = arith.constant 0 : index
    %c0_11 = arith.constant 0 : index
    %22 = vector.load %arg2[%c0_9, %c0_10, %c0_11] : memref<1x8x8xf32, #tpu.memory_space<vmem>>, vector<1x8x8xf32>
    tpu.vector_store %arg2[%c0_9, %c0_10, %c0_11], %19 {strides = array<i32>} : memref<1x8x8xf32, #tpu.memory_space<vmem>>, vector<1x8x8xf32>,
    %c0_12 = arith.constant 0 : index
    %c0_13 = arith.constant 0 : index
    %c0_14 = arith.constant 0 : index
    %23 = vector.load %arg3[%c0_12, %c0_13, %c0_14] : memref<1x8x8xf32, #tpu.memory_space<vmem>>, vector<1x8x8xf32>
    tpu.vector_store %arg3[%c0_12, %c0_13, %c0_14], %8 {strides = array<i32>} : memref<1x8x8xf32, #tpu.memory_space<vmem>>, vector<1x8x8xf32>,
    %24 = vector.shape_cast %21 : vector<1x8xf32> to vector<1x1x8xf32>
    %c0_15 = arith.constant 0 : index
    %c0_16 = arith.constant 0 : index
    %c0_17 = arith.constant 0 : index
    %25 = vector.load %arg4[%c0_15, %c0_16, %c0_17] : memref<1x1x8xf32, #tpu.memory_space<vmem>>, vector<1x1x8xf32>
    tpu.vector_store %arg4[%c0_15, %c0_16, %c0_17], %24 {strides = array<i32>} : memref<1x1x8xf32, #tpu.memory_space<vmem>>, vector<1x1x8xf32>,
    return
  }
  func.func @transform_0(%arg0: i32) -> (i32, i32, i32) {
    %c0_i32 = arith.constant 0 : i32
    %c0_i32_0 = arith.constant 0 : i32
    %c0_i32_1 = arith.constant 0 : i32
    return %arg0, %c0_i32, %c0_i32_0 : i32, i32, i32
  }
  func.func @transform_1(%arg0: i32) -> (i32, i32, i32) {
    %c0_i32 = arith.constant 0 : i32
    %c0_i32_0 = arith.constant 0 : i32
    %c0_i32_1 = arith.constant 0 : i32
    return %arg0, %c0_i32, %c0_i32_0 : i32, i32, i32
  }
  func.func @transform_2(%arg0: i32) -> (i32, i32, i32) {
    %c0_i32 = arith.constant 0 : i32
    %c0_i32_0 = arith.constant 0 : i32
    %c0_i32_1 = arith.constant 0 : i32
    return %arg0, %c0_i32, %c0_i32_0 : i32, i32, i32
  }
  func.func @transform_3(%arg0: i32) -> (i32, i32, i32) {
    %c0_i32 = arith.constant 0 : i32
    %c0_i32_0 = arith.constant 0 : i32
    %c0_i32_1 = arith.constant 0 : i32
    return %arg0, %c0_i32, %c0_i32_0 : i32, i32, i32
  }
}

</mosaic_0001>

<llo_original>
// kernel: tpu_custom_call.1
$region0: #{tpu_custom_call.1}
  #allocation0 [shape = 'u32[]', space=smem, size = 0x4, offset = 0x4, fixed_abs, tag = 'smem constant byte address 0x4 - core index']
  #allocation1 [shape = 'u32[144,128]{1,0:T(1,128)}', space=vmem, size = 0x12000, scoped, tag = 'internal scratch']
  %s0 = inlined_call_operand.hbm [shape: f32[2,16,32], index: 0, kind: input, shape index: {}]
  %s1 = inlined_call_operand.hbm [shape: f32[2,8,8], index: 1, kind: output, shape index: {0}]
  %s2 = inlined_call_operand.hbm [shape: f32[2,8,8], index: 2, kind: output, shape index: {1}]
  %s3 = inlined_call_operand.hbm [shape: f32[2,1,8], index: 3, kind: output, shape index: {2}]
  %4 = xla_tuple %s1, %s2, %s3
  %s5 = sld [smem:[#allocation0]]
  $region57: #{tpu_custom_call.1} parent=0
    _
  %s7 = ssub.s32 1, %s5
  %s8 = scalar_select 0, %s7, %s5
  $region1: #{tpu_custom_call.1} parent=0
    #allocation2 [shape = 'u8[16384]{0}', space=vmem, size = 0x4000, scoped, tag = 'input window, operand 0']
    #allocation3 [shape = 's32[2]{0}', space=sflag, size = 0x8, scoped, tag = 'scoped memory for tpu_custom_call.1']
    #allocation4 [shape = 's32[2]{0}', space=sflag, size = 0x8, scoped, tag = 'scoped memory for tpu_custom_call.1']
    #allocation5 [shape = 'u8[8192]{0}', space=vmem, size = 0x2000, scoped, tag = 'output window, operand 0']
    #allocation6 [shape = 'u8[8192]{0}', space=vmem, size = 0x2000, scoped, tag = 'output window, operand 1']
    #allocation7 [shape = 's32[2]{0}', space=sflag, size = 0x8, scoped, tag = 'scoped memory for tpu_custom_call.1']
    #allocation8 [shape = 'u8[1024]{0}', space=vmem, size = 0x400, scoped, tag = 'output window, operand 2']
    %9 = vsyncpa [#allocation3], 0
    %s10 = scalar_lea.sflag [#allocation3], 1
    %11 = vsyncpa %s10, 0
    %12 = vsyncpa [#allocation4], 0
    %s13 = scalar_lea.sflag [#allocation4], 1
    %14 = vsyncpa %s13, 0
    %15 = vsyncpa [#allocation7], 0
    %s16 = scalar_lea.sflag [#allocation7], 1
    %17 = vsyncpa %s16, 0
    loop: start=0, step=1, limit=4
    $region2: #{tpu_custom_call.1} parent=1 // loop_pre_header
      _
    $region3: #{tpu_custom_call.1} parent=1 // loop_header
      %s19 = sphi 0, %s23
      %p20 = scmp.ge.s32.totalorder %s19, 4
      %s29 = sphi 0, %s31
      %s32 = sphi 0, %s29
      %s33 = sphi 0, %s32
      %s49 = sphi 0, %s33
      %s55 = sphi 0, %s57
      %s58 = sphi 0, %s55
      %s59 = sphi 0, %s58
      %s75 = sphi 0, %s59
      %s81 = sphi 0, %s83
      %s84 = sphi 0, %s81
      %s85 = sphi 0, %s84
      %s101 = sphi 0, %s85
      %s107 = sphi 0, %s109
      %s110 = sphi 0, %s107
      %s111 = sphi 0, %s110
      %s127 = sphi 0, %s111
    $region4: #{tpu_custom_call.1} parent=1 // loop_header_branch
      %22 = sbr.rel (%p20) target = $region8
    $region5: #{tpu_custom_call.1} parent=1 // loop_body
      %s24 = ssub.s32 %s19, 1
      %s25 = ssub.s32 %s19, 2
      %s26 = sadd.s32 %s19, 1
      %s27 = ssub.s32 %s19, %s26
      %p28 = scmp.eq.s32.totalorder %s27, 0
      %s30 = sadd.s32 %s29, 1
      %s31 = scalar_select %p28, %s29, %s30
      %p34 = pneg %p28
      %p35 = scmp.eq.s32.totalorder %s19, 1
      %p36 = por %p34, %p35
      %p37 = scmp.ne.s32.totalorder %s29, %s32
      %p38 = scmp.eq.s32.totalorder %s19, 0
      %p39 = por %p37, %p38
      %p40 = scmp.ne.s32.totalorder %s29, %s32
      %p41 = scmp.eq.s32.totalorder %s24, 1
      %p42 = por %p40, %p41
      %p43 = scmp.ne.s32.totalorder %s32, %s33
      %p44 = scmp.eq.s32.totalorder %s24, 0
      %p45 = por %p43, %p44
      %p46 = scmp.ne.s32.totalorder %s32, %s33
      %p47 = scmp.eq.s32.totalorder %s25, 1
      %p48 = por %p46, %p47
      %p50 = scmp.ne.s32.totalorder %s33, %s49
      %p51 = scmp.eq.s32.totalorder %s25, 0
      %p52 = por %p50, %p51
      %s53 = ssub.s32 %s19, %s26
      %p54 = scmp.eq.s32.totalorder %s53, 0
      %s56 = sadd.s32 %s55, 1
      %s57 = scalar_select %p54, %s55, %s56
      %p60 = pneg %p54
      %p61 = scmp.eq.s32.totalorder %s19, 1
      %p62 = por %p60, %p61
      %p63 = scmp.ne.s32.totalorder %s55, %s58
      %p64 = scmp.eq.s32.totalorder %s19, 0
      %p65 = por %p63, %p64
      %p66 = scmp.ne.s32.totalorder %s55, %s58
      %p67 = scmp.eq.s32.totalorder %s24, 1
      %p68 = por %p66, %p67
      %p69 = scmp.ne.s32.totalorder %s58, %s59
      %p70 = scmp.eq.s32.totalorder %s24, 0
      %p71 = por %p69, %p70
      %p72 = scmp.ne.s32.totalorder %s58, %s59
      %p73 = scmp.eq.s32.totalorder %s25, 1
      %p74 = por %p72, %p73
      %p76 = scmp.ne.s32.totalorder %s59, %s75
      %p77 = scmp.eq.s32.totalorder %s25, 0
      %p78 = por %p76, %p77
      %s79 = ssub.s32 %s19, %s26
      %p80 = scmp.eq.s32.totalorder %s79, 0
      %s82 = sadd.s32 %s81, 1
      %s83 = scalar_select %p80, %s81, %s82
      %p86 = pneg %p80
      %p87 = scmp.eq.s32.totalorder %s19, 1
      %p88 = por %p86, %p87
      %p89 = scmp.ne.s32.totalorder %s81, %s84
      %p90 = scmp.eq.s32.totalorder %s19, 0
      %p91 = por %p89, %p90
      %p92 = scmp.ne.s32.totalorder %s81, %s84
      %p93 = scmp.eq.s32.totalorder %s24, 1
      %p94 = por %p92, %p93
      %p95 = scmp.ne.s32.totalorder %s84, %s85
      %p96 = scmp.eq.s32.totalorder %s24, 0
      %p97 = por %p95, %p96
      %p98 = scmp.ne.s32.totalorder %s84, %s85
      %p99 = scmp.eq.s32.totalorder %s25, 1
      %p100 = por %p98, %p99
      %p102 = scmp.ne.s32.totalorder %s85, %s101
      %p103 = scmp.eq.s32.totalorder %s25, 0
      %p104 = por %p102, %p103
      %s105 = ssub.s32 %s19, %s26
      %p106 = scmp.eq.s32.totalorder %s105, 0
      %s108 = sadd.s32 %s107, 1
      %s109 = scalar_select %p106, %s107, %s108
      %p112 = pneg %p106
      %p113 = scmp.eq.s32.totalorder %s19, 1
      %p114 = por %p112, %p113
      %p115 = scmp.ne.s32.totalorder %s107, %s110
      %p116 = scmp.eq.s32.totalorder %s19, 0
      %p117 = por %p115, %p116
      %p118 = scmp.ne.s32.totalorder %s107, %s110
      %p119 = scmp.eq.s32.totalorder %s24, 1
      %p120 = por %p118, %p119
      %p121 = scmp.ne.s32.totalorder %s110, %s111
      %p122 = scmp.eq.s32.totalorder %s24, 0
      %p123 = por %p121, %p122
      %p124 = scmp.ne.s32.totalorder %s110, %s111
      %p125 = scmp.eq.s32.totalorder %s25, 1
      %p126 = por %p124, %p125
      %p128 = scmp.ne.s32.totalorder %s111, %s127
      %p129 = scmp.eq.s32.totalorder %s25, 0
      %p130 = por %p128, %p129
      %p131 = scmp.le.s32.totalorder 1, %s19
      %p132 = scmp.lt.s32.totalorder %s19, 3
      %p133 = pnand %p131, %p132
      %p134 = pneg %p133
      // Predicated region
      $region9: #{tpu_custom_call.1} parent=5 // pred_check
        _
      $region10: #{tpu_custom_call.1} parent=5 // pred_check_branch
        %136 = sbr.rel (%p133) target = $region12
      $region11: #{tpu_custom_call.1} parent=5 // pred_region
        %s137 = ssub.s32 %s19, 1
      $region12: #{tpu_custom_call.1} parent=5 // pred_fallthru
        _
      %p138 = scmp.lt.s32.totalorder %s19, 2
      // Predicated region
      $region13: #{tpu_custom_call.1} parent=5 // pred_check
        %p139 = pneg %p138
      $region14: #{tpu_custom_call.1} parent=5 // pred_check_branch
        %141 = sbr.rel (%p139) target = $region16
      $region15: #{tpu_custom_call.1} parent=5 // pred_region
        // Predicated region
        $region17: #{tpu_custom_call.1} parent=15 // pred_check
          %p142 = pneg %p39
        $region18: #{tpu_custom_call.1} parent=15 // pred_check_branch
          %144 = sbr.rel (%p142) target = $region20
        $region19: #{tpu_custom_call.1} parent=15 // pred_region
          %s145 = sand.u32 %s29, 1
          %s146 = scalar_lea.sflag [#allocation3], %s145
          %s147 = sand.u32 %s29, 1
          %s148 = smul.addr %s147, 16
          %s149 = scalar_lea.vmem [#allocation2], %s148
          %s151 = ssub.s32 256, 256
          %152 = vsyncadd %s146, %s151
          %s153 = smul.addr %s19, 2
          %s154 = smul.addr %s153, 128
          %s155 = scalar_lea.hbm %s0, %s154
          %s156 = sshll.u32 %s149, 4
          %s157 = int_to_ptr.vmem [resolvable:$true] %s156
          %162 = dma.hbm_to_vmem [thread:$0]  %s155, 256, %s157, %s146, 128, 128, 8
        $region20: #{tpu_custom_call.1} parent=15 // pred_fallthru
          _
      $region16: #{tpu_custom_call.1} parent=5 // pred_fallthru
        _
      %p163 = scmp.le.s32.totalorder 1, %s19
      %p164 = scmp.lt.s32.totalorder %s19, 3
      %p165 = pnand %p163, %p164
      %p166 = pneg %p165
      // Predicated region
      $region21: #{tpu_custom_call.1} parent=5 // pred_check
        _
      $region22: #{tpu_custom_call.1} parent=5 // pred_check_branch
        %168 = sbr.rel (%p165) target = $region24
      $region23: #{tpu_custom_call.1} parent=5 // pred_region
        %s169 = ssub.s32 %s19, 1
        %s170 = sand.u32 %s32, 1
        %s171 = scalar_lea.sflag [#allocation3], %s170
        %s172 = sand.u32 %s32, 1
        %s173 = smul.addr %s172, 16
        %s174 = scalar_lea.vmem [#allocation2], %s173
        // Predicated region
        $region25: #{tpu_custom_call.1} parent=23 // pred_check
          %p175 = pneg %p45
        $region26: #{tpu_custom_call.1} parent=23 // pred_check_branch
          %177 = sbr.rel (%p175) target = $region28
        $region27: #{tpu_custom_call.1} parent=23 // pred_region
          %178 = dma.done %s171, 256
        $region28: #{tpu_custom_call.1} parent=23 // pred_fallthru
          _
        %s179 = sand.u32 %s32, 1
        %s180 = scalar_lea.sflag [#allocation3], %s179
        %s181 = sand.u32 %s32, 1
        %s182 = smul.addr %s181, 16
        %s183 = scalar_lea.vmem [#allocation2], %s182
        %p184 = pneg %p45
        %p185 = pneg %p42
        %p186 = pneg %p71
        %p187 = pneg %p68
        %s188 = sand.u32 %s58, 1
        %s189 = scalar_lea.sflag [#allocation4], %s188
        %s190 = sand.u32 %s58, 1
        %s191 = smul.addr %s190, 8
        %s192 = scalar_lea.vmem [#allocation5], %s191
        %p193 = pneg %p97
        %p194 = pneg %p94
        %s195 = sand.u32 %s24, 1
        %s196 = scalar_lea.sflag [#allocation7], %s195
        %s197 = sand.u32 %s84, 1
        %s198 = smul.addr %s197, 8
        %s199 = scalar_lea.vmem [#allocation6], %s198
        %p200 = pneg %p123
        %p201 = pneg %p120
        %s202 = sand.u32 %s24, 1
        %s203 = scalar_lea.sflag [#allocation7], %s202
        %s204 = sand.u32 %s110, 1
        %s205 = scalar_lea.vmem [#allocation8], %s204
        %v206 = vld [vmem:[%s174] sm:$0xff]
        %v207 = vld [vmem:[%s174 + $0x8] sm:$0xff]
        %vm208 = vcmask 261120
        %v210 = vsel %vm208, %v206, 0
        %212 = vmatprep.subr.mxu0 0.0
        %213 = vmatpush1.xpose.msra.mxu0 0.0
        %214 = vmatprep.subr.mxu0 0.0
        %215 = vmatpush1.xpose.msra.mxu0 0.0
        %216 = vmatprep.subr.mxu0 0.0
        %217 = vmatpush1.xpose.msra.mxu0 0.0
        %218 = vmatprep.subr.mxu0 0.0
        %219 = vmatpush1.xpose.msra.mxu0 0.0
        %220 = vmatprep.subr.mxu0 0.0
        %221 = vmatpush1.xpose.msra.mxu0 0.0
        %222 = vmatprep.subr.mxu0 0.0
        %223 = vmatpush1.xpose.msra.mxu0 0.0
        %224 = vmatprep.subr.mxu0 0.0
        %225 = vmatpush1.xpose.msra.mxu0 0.0
        %226 = vmatprep.subr.mxu0 0.0
        %227 = vmatpush1.xpose.msra.mxu0 0.0
        %228 = vmatprep.subr.mxu0 0.0
        %229 = vmatpush1.xpose.msra.mxu0 0.0
        %230 = vmatprep.subr.mxu0 0.0
        %231 = vmatpush1.xpose.msra.mxu0 0.0
        %232 = vmatprep.subr.mxu0 0.0
        %233 = vmatpush1.xpose.msra.mxu0 0.0
        %234 = vmatprep.subr.mxu0 0.0
        %235 = vmatpush1.xpose.msra.mxu0 0.0
        %236 = vmatprep.subr.mxu0 0.0
        %237 = vmatpush1.xpose.msra.mxu0 0.0
        %238 = vmatprep.subr.mxu0 0.0
        %239 = vmatpush1.xpose.msra.mxu0 0.0
        %240 = vmatprep.subr.mxu0 0.0
        %241 = vmatpush1.xpose.msra.mxu0 0.0
        %242 = vmatprep.subr.mxu0 0.0
        %243 = vmatpush1.xpose.msra.mxu0 %v210
        %244 = vmatprep.subr.mxu0 0.0
        %245 = vmatpush2.xpose.msra.mxu0 0.0
        %246 = vmatprep.subr.mxu0 0.0
        %247 = vmatpush2.xpose.msra.mxu0 0.0
        %248 = vmatprep.subr.mxu0 0.0
        %249 = vmatpush2.xpose.msra.mxu0 0.0
        %250 = vmatprep.subr.mxu0 0.0
        %251 = vmatpush2.xpose.msra.mxu0 0.0
        %252 = vmatprep.subr.mxu0 0.0
        %253 = vmatpush2.xpose.msra.mxu0 0.0
        %254 = vmatprep.subr.mxu0 0.0
        %255 = vmatpush2.xpose.msra.mxu0 0.0
        %256 = vmatprep.subr.mxu0 0.0
        %257 = vmatpush2.xpose.msra.mxu0 0.0
        %258 = vmatprep.subr.mxu0 0.0
        %259 = vmatpush2.xpose.msra.mxu0 0.0
        %260 = vmatprep.subr.mxu0 0.0
        %261 = vmatpush2.xpose.msra.mxu0 0.0
        %262 = vmatprep.subr.mxu0 0.0
        %263 = vmatpush2.xpose.msra.mxu0 0.0
        %264 = vmatprep.subr.mxu0 0.0
        %265 = vmatpush2.xpose.msra.mxu0 0.0
        %266 = vmatprep.subr.mxu0 0.0
        %267 = vmatpush2.xpose.msra.mxu0 0.0
        %268 = vmatprep.subr.mxu0 0.0
        %269 = vmatpush2.xpose.msra.mxu0 0.0
        %270 = vmatprep.subr.mxu0 0.0
        %271 = vmatpush2.xpose.msra.mxu0 0.0
        %272 = vmatprep.subr.mxu0 0.0
        %273 = vmatpush2.xpose.msra.mxu0 0.0
        %274 = vmatprep.subr.mxu0 0.0
        %275 = vmatpush2.xpose.msra.mxu0 0.0
        %276 = vmatprep.mubr.f32.mxu0 0.0
        %277 = vmatmul.mubr.f32.gmra.mxu0 %v210
        %v278 = vpop.f32.mrf.mxu0
        %v279 = vadd.f32 0.0, %v278
        %v280 = vpop.f32.mrf.mxu0
        %281 = vdwg.mxu0
        %v282 = vmul.f32 %v279, 0.03125
        %v284 = vsel %vm208, %v207, 0
        %286 = vmatprep.subr.mxu0 0.0
        %287 = vmatpush1.xpose.msra.mxu0 0.0
        %288 = vmatprep.subr.mxu0 0.0
        %289 = vmatpush1.xpose.msra.mxu0 0.0
        %290 = vmatprep.subr.mxu0 0.0
        %291 = vmatpush1.xpose.msra.mxu0 0.0
        %292 = vmatprep.subr.mxu0 0.0
        %293 = vmatpush1.xpose.msra.mxu0 0.0
        %294 = vmatprep.subr.mxu0 0.0
        %295 = vmatpush1.xpose.msra.mxu0 0.0
        %296 = vmatprep.subr.mxu0 0.0
        %297 = vmatpush1.xpose.msra.mxu0 0.0
        %298 = vmatprep.subr.mxu0 0.0
        %299 = vmatpush1.xpose.msra.mxu0 0.0
        %300 = vmatprep.subr.mxu0 0.0
        %301 = vmatpush1.xpose.msra.mxu0 0.0
        %302 = vmatprep.subr.mxu0 0.0
        %303 = vmatpush1.xpose.msra.mxu0 0.0
        %304 = vmatprep.subr.mxu0 0.0
        %305 = vmatpush1.xpose.msra.mxu0 0.0
        %306 = vmatprep.subr.mxu0 0.0
        %307 = vmatpush1.xpose.msra.mxu0 0.0
        %308 = vmatprep.subr.mxu0 0.0
        %309 = vmatpush1.xpose.msra.mxu0 0.0
        %310 = vmatprep.subr.mxu0 0.0
        %311 = vmatpush1.xpose.msra.mxu0 0.0
        %312 = vmatprep.subr.mxu0 0.0
        %313 = vmatpush1.xpose.msra.mxu0 0.0
        %314 = vmatprep.subr.mxu0 0.0
        %315 = vmatpush1.xpose.msra.mxu0 0.0
        %316 = vmatprep.subr.mxu0 0.0
        %317 = vmatpush1.xpose.msra.mxu0 %v284
        %318 = vmatprep.subr.mxu0 0.0
        %319 = vmatpush2.xpose.msra.mxu0 0.0
        %320 = vmatprep.subr.mxu0 0.0
        %321 = vmatpush2.xpose.msra.mxu0 0.0
        %322 = vmatprep.subr.mxu0 0.0
        %323 = vmatpush2.xpose.msra.mxu0 0.0
        %324 = vmatprep.subr.mxu0 0.0
        %325 = vmatpush2.xpose.msra.mxu0 0.0
        %326 = vmatprep.subr.mxu0 0.0
        %327 = vmatpush2.xpose.msra.mxu0 0.0
        %328 = vmatprep.subr.mxu0 0.0
        %329 = vmatpush2.xpose.msra.mxu0 0.0
        %330 = vmatprep.subr.mxu0 0.0
        %331 = vmatpush2.xpose.msra.mxu0 0.0
        %332 = vmatprep.subr.mxu0 0.0
        %333 = vmatpush2.xpose.msra.mxu0 0.0
        %334 = vmatprep.subr.mxu0 0.0
        %335 = vmatpush2.xpose.msra.mxu0 0.0
        %336 = vmatprep.subr.mxu0 0.0
        %337 = vmatpush2.xpose.msra.mxu0 0.0
        %338 = vmatprep.subr.mxu0 0.0
        %339 = vmatpush2.xpose.msra.mxu0 0.0
        %340 = vmatprep.subr.mxu0 0.0
        %341 = vmatpush2.xpose.msra.mxu0 0.0
        %342 = vmatprep.subr.mxu0 0.0
        %343 = vmatpush2.xpose.msra.mxu0 0.0
        %344 = vmatprep.subr.mxu0 0.0
        %345 = vmatpush2.xpose.msra.mxu0 0.0
        %346 = vmatprep.subr.mxu0 0.0
        %347 = vmatpush2.xpose.msra.mxu0 0.0
        %348 = vmatprep.subr.mxu0 0.0
        %349 = vmatpush2.xpose.msra.mxu0 0.0
        %350 = vmatprep.mubr.f32.mxu0 0.0
        %351 = vmatmul.mubr.f32.gmra.mxu0 %v210
        %v352 = vpop.f32.mrf.mxu0
        %v353 = vadd.f32 0.0, %v352
        %v354 = vpop.f32.mrf.mxu0
        %355 = vdwg.mxu0
        %v356 = vmul.f32 %v353, 0.03125
        %v357 = vmul.f32 %v207, %v207
        %v358 = vsel %vm208, %v357, 0.0
        %359 = vadd.xlane.f32.xlu0 %v358
        %v360 = vpop.xlane.xlu0 %359
        %v361 = vmul.f32 %v360, 0.03125
        %v362 = vlaneseq
        %v363 = vshrl.u32 %v362, 7
        %v364 = vlaneseq
        %v365 = vand.u32 %v364, 127
        %vm366 = vcmp.eq.s32.totalorder %v363, %v365
        %v367 = vadd.f32 %v282, 0.001
        %v368 = vsel %vm366, %v367, %v282
        %v369 = vadd.f32 %v361, 0.001
        %vm370 = vcmask 64512
        %371 = vst.msk [vmem:[%s192] sm:$0xff] %vm370, %v368
        %372 = vst.msk [vmem:[%s199] sm:$0xff] %vm370, %v356
        %v374 = vlaneseq
        %v375 = vshrl.u32 %v374, 7
        %v376 = vsub.s32 %v365, %v375
        %v377 = vrot.slane %v369, %v376
        %vm379 = vcmask 57344
        %380 = vst.msk [vmem:[%s205] sm:$0x1] %vm379, %v377
        %s381 = sand.u32 %s58, 1
        %s382 = scalar_lea.sflag [#allocation4], %s381
        %s383 = sand.u32 %s58, 1
        %s384 = smul.addr %s383, 8
        %s385 = scalar_lea.vmem [#allocation5], %s384
        %s386 = sand.u32 %s24, 1
        %s387 = scalar_lea.sflag [#allocation7], %s386
        %s388 = sand.u32 %s84, 1
        %s389 = smul.addr %s388, 8
        %s390 = scalar_lea.vmem [#allocation6], %s389
        %s391 = sand.u32 %s24, 1
        %s392 = scalar_lea.sflag [#allocation7], %s391
        %s393 = sand.u32 %s110, 1
        %s394 = scalar_lea.vmem [#allocation8], %s393
        // Predicated region
        $region29: #{tpu_custom_call.1} parent=23 // pred_check
          %p395 = pneg %p68
        $region30: #{tpu_custom_call.1} parent=23 // pred_check_branch
          %397 = sbr.rel (%p395) target = $region32
        $region31: #{tpu_custom_call.1} parent=23 // pred_region
          %s399 = ssub.s32 128, 128
          %400 = vsyncadd %s382, %s399
          %s401 = smul.addr %s24, 128
          %s402 = scalar_lea.hbm %s1, %s401
          %s404 = sshll.u32 %s385, 4
          %s405 = int_to_ptr.vmem [resolvable:$true] %s404
          %407 = dma.vmem_to_hbm [thread:$0]  %s405, 128, %s402, %s382
        $region32: #{tpu_custom_call.1} parent=23 // pred_fallthru
          _
        // Predicated region
        $region33: #{tpu_custom_call.1} parent=23 // pred_check
          %p408 = pneg %p94
        $region34: #{tpu_custom_call.1} parent=23 // pred_check_branch
          %410 = sbr.rel (%p408) target = $region36
        $region35: #{tpu_custom_call.1} parent=23 // pred_region
          %s412 = ssub.s32 128, 128
          %413 = vsyncadd %s387, %s412
          %s414 = smul.addr %s24, 128
          %s415 = scalar_lea.hbm %s2, %s414
          %s417 = sshll.u32 %s390, 4
          %s418 = int_to_ptr.vmem [resolvable:$true] %s417
          %420 = dma.vmem_to_hbm [thread:$0]  %s418, 128, %s415, %s387
        $region36: #{tpu_custom_call.1} parent=23 // pred_fallthru
          _
        // Predicated region
        $region37: #{tpu_custom_call.1} parent=23 // pred_check
          %p421 = pneg %p120
        $region38: #{tpu_custom_call.1} parent=23 // pred_check_branch
          %423 = sbr.rel (%p421) target = $region40
        $region39: #{tpu_custom_call.1} parent=23 // pred_region
          %s425 = ssub.s32 16, 16
          %426 = vsyncadd %s392, %s425
          %s427 = smul.addr %s24, 16
          %s428 = scalar_lea.hbm %s3, %s427
          %s430 = sshll.u32 %s394, 4
          %s431 = int_to_ptr.vmem [resolvable:$true] %s430
          %433 = dma.vmem_to_hbm [thread:$0]  %s431, 16, %s428, %s392
        $region40: #{tpu_custom_call.1} parent=23 // pred_fallthru
          _
      $region24: #{tpu_custom_call.1} parent=5 // pred_fallthru
        _
      %p434 = scmp.le.s32.totalorder 2, %s19
      // Predicated region
      $region41: #{tpu_custom_call.1} parent=5 // pred_check
        %p435 = pneg %p434
      $region42: #{tpu_custom_call.1} parent=5 // pred_check_branch
        %437 = sbr.rel (%p435) target = $region44
      $region43: #{tpu_custom_call.1} parent=5 // pred_region
        %s438 = ssub.s32 %s19, 2
        // Predicated region
        $region45: #{tpu_custom_call.1} parent=43 // pred_check
          %p439 = pneg %p74
        $region46: #{tpu_custom_call.1} parent=43 // pred_check_branch
          %441 = sbr.rel (%p439) target = $region48
        $region47: #{tpu_custom_call.1} parent=43 // pred_region
          %s442 = sand.u32 %s59, 1
          %s443 = scalar_lea.sflag [#allocation4], %s442
          %s444 = sand.u32 %s59, 1
          %s445 = smul.addr %s444, 8
          %s446 = scalar_lea.vmem [#allocation5], %s445
          %447 = dma.done %s443, 128
        $region48: #{tpu_custom_call.1} parent=43 // pred_fallthru
          _
        // Predicated region
        $region49: #{tpu_custom_call.1} parent=43 // pred_check
          %p448 = pneg %p100
        $region50: #{tpu_custom_call.1} parent=43 // pred_check_branch
          %450 = sbr.rel (%p448) target = $region52
        $region51: #{tpu_custom_call.1} parent=43 // pred_region
          %s451 = sand.u32 %s25, 1
          %s452 = scalar_lea.sflag [#allocation7], %s451
          %s453 = sand.u32 %s85, 1
          %s454 = smul.addr %s453, 8
          %s455 = scalar_lea.vmem [#allocation6], %s454
          %456 = dma.done %s452, 128
        $region52: #{tpu_custom_call.1} parent=43 // pred_fallthru
          _
        // Predicated region
        $region53: #{tpu_custom_call.1} parent=43 // pred_check
          %p457 = pneg %p126
        $region54: #{tpu_custom_call.1} parent=43 // pred_check_branch
          %459 = sbr.rel (%p457) target = $region56
        $region55: #{tpu_custom_call.1} parent=43 // pred_region
          %s460 = sand.u32 %s25, 1
          %s461 = scalar_lea.sflag [#allocation7], %s460
          %s462 = sand.u32 %s111, 1
          %s463 = scalar_lea.vmem [#allocation8], %s462
          %464 = dma.done %s461, 16
        $region56: #{tpu_custom_call.1} parent=43 // pred_fallthru
          _
      $region44: #{tpu_custom_call.1} parent=5 // pred_fallthru
        _
    $region6: #{tpu_custom_call.1} parent=1 // loop_footer
      %s23 = sadd.s32 1, %s19
    $region7: #{tpu_custom_call.1} parent=1 // loop_footer_branch
      %18 = sbr.rel target = $region3
    $region8: #{tpu_custom_call.1} parent=1 // loop_exit
      _
    %465 = vsyncpa [#allocation3], 1
    %s466 = scalar_lea.sflag [#allocation3], 1
    %467 = vsyncpa %s466, 1
    %468 = vsyncpa [#allocation4], 1
    %s469 = scalar_lea.sflag [#allocation4], 1
    %470 = vsyncpa %s469, 1
    %471 = vsyncpa [#allocation7], 1
    %s472 = scalar_lea.sflag [#allocation7], 1
    %473 = vsyncpa %s472, 1

</llo_original>
